<compile_context>
chip_gen: v7x
topology: tpu7x:2x2x1
jax: 0.10.0
libtpu: 0.0.40
codegen_flags: <defaults>
</compile_context>

<pallas_src>
import functools

import jax
import jax.numpy as jnp
from jax.experimental import pallas as pl
from jax.experimental.pallas import tpu as pltpu


def _round_up(x: int, m: int) -> int:
    return ((x + m - 1) // m) * m


# ----------------------------------------------------------------------------
# Fused kernel: full encoder + decoder chain for one batch tile.
# Activations are (d_pad, tm): features on sublanes, batch on lanes.
# ----------------------------------------------------------------------------
def _fused_ae_kernel(x_ref, w_ref, b_ref, out_ref, *,
                     n_layers: int, n_enc_layers: int, relu_flags,
                     input_dim: int, latent_dim: int, d_pad: int):
    f32 = jnp.float32

    # (tm, input_dim) batch tile; pad feature columns to d_pad if needed so the
    # layer-0 contraction is over d_pad (padded weight columns are zero).
    x = x_ref[...].astype(f32)
    if input_dim < d_pad:
        x = jnp.concatenate(
            [x, jnp.zeros((x.shape[0], d_pad - input_dim), f32)], axis=1)

    h = None
    for li in range(n_layers):
        w = w_ref[li].astype(f32)        # (d_pad, d_pad), zero-padded
        b = b_ref[li].astype(f32)        # (d_pad, 1),    zero-padded
        if li == 0:
            # h = W0 @ x^T expressed as a last-dim contraction -> (d_pad, tm),
            # batch ends up on lanes without materializing a transpose.
            h = jax.lax.dot_general(
                w, x, (((1,), (1,)), ((), ())), preferred_element_type=f32)
        else:
            h = jnp.dot(w, h, preferred_element_type=f32)      # (d_pad, tm)
        h = h + b                         # lane-broadcast bias, f32 vregs
        if relu_flags[li]:
            h = jnp.maximum(h, 0.0)
        if li == n_enc_layers - 1:
            # Latent z = first latent_dim rows of the encoder output.
            out_ref[input_dim:input_dim + latent_dim, :] = (
                h[:latent_dim, :].astype(out_ref.dtype))
    # Reconstruction occupies the first input_dim rows of the packed out slab.
    out_ref[:input_dim, :] = h[:input_dim, :].astype(out_ref.dtype)


# ----------------------------------------------------------------------------
# Host-side packing of layer params into two zero-padded VMEM-resident slabs.
# ----------------------------------------------------------------------------
def pack_autoencoder_params(params):
    layers = params["encoder"] + params["decoder"]
    n_layers = len(layers)
    n_enc = len(params["encoder"])
    relu_flags = tuple(bool(l[2]) for l in layers)
    input_dim = layers[0][0].shape[1]                 # W stored (out, in)
    latent_dim = params["encoder"][-1][0].shape[0]

    dims = [input_dim] + [w.shape[0] for (w, _b, _r) in layers]
    d_pad = max(8, _round_up(max(dims), 8))

    dtype = layers[0][0].dtype
    w_slab = jnp.zeros((n_layers, d_pad, d_pad), dtype)
    b_slab = jnp.zeros((n_layers, d_pad, 1), dtype)
    for li, (w, b, _r) in enumerate(layers):
        d_out, d_in = w.shape
        w_slab = w_slab.at[li, :d_out, :d_in].set(w)
        b_slab = b_slab.at[li, :d_out, 0].set(b)

    return {
        "w_slab": w_slab, "b_slab": b_slab, "relu_flags": relu_flags,
        "n_layers": n_layers, "n_enc_layers": n_enc,
        "input_dim": input_dim, "latent_dim": latent_dim, "d_pad": d_pad,
    }


# ----------------------------------------------------------------------------
# Wrapper: one pallas_call over a (parallel) batch-tile grid.
# ----------------------------------------------------------------------------
def autoencoder_mlp_forward(packed, x, *, block_m: int = 256):
    """Fused forward. Returns (x_recon, z), matching Autoencoder_MLP.forward."""
    w_slab = packed["w_slab"]
    b_slab = packed["b_slab"]
    input_dim = packed["input_dim"]
    latent_dim = packed["latent_dim"]
    d_pad = packed["d_pad"]
    n_layers = packed["n_layers"]

    batch, in_dim = x.shape
    assert in_dim == input_dim
    out_rows = input_dim + latent_dim

    # Batch tiling: batch lives on the lane axis of the output slab, so the
    # tile width must be a multiple of 128 unless it equals the full batch.
    if batch <= block_m:
        tm = batch
    else:
        tm = _round_up(block_m, 128)
    grid = (pl.cdiv(batch, tm),)   # ragged last tile handled by Pallas masking

    in_specs = [
        pl.BlockSpec((tm, input_dim), lambda i: (i, 0)),       # x tile
        pl.BlockSpec(w_slab.shape, lambda i: (0, 0, 0)),       # resident slab
        pl.BlockSpec(b_slab.shape, lambda i: (0, 0, 0)),       # resident slab
    ]
    out_specs = pl.BlockSpec((out_rows, tm), lambda i: (0, i))
    out_shape = jax.ShapeDtypeStruct((out_rows, batch), x.dtype)

    # Advisory cost estimate for XLA scheduling around the custom call.
    flops = 2 * grid[0] * tm * n_layers * d_pad * d_pad
    bytes_accessed = (
        x.size * x.dtype.itemsize
        + w_slab.size * w_slab.dtype.itemsize
        + b_slab.size * b_slab.dtype.itemsize
        + out_rows * batch * jnp.dtype(x.dtype).itemsize
    )
    cost = pl.CostEstimate(flops=flops, transcendentals=0,
                           bytes_accessed=bytes_accessed)

    kernel = functools.partial(
        _fused_ae_kernel,
        n_layers=n_layers,
        n_enc_layers=packed["n_enc_layers"],
        relu_flags=packed["relu_flags"],
        input_dim=input_dim,
        latent_dim=latent_dim,
        d_pad=d_pad,
    )

    out = pl.pallas_call(
        kernel,
        out_shape=out_shape,
        grid=grid,
        in_specs=in_specs,
        out_specs=out_specs,
        compiler_params=pltpu.CompilerParams(
            dimension_semantics=("parallel",)),
        cost_estimate=cost,
    )(x, w_slab, b_slab)

    # Layout plumbing back to module semantics (batch-major outputs).
    x_recon = out[:input_dim].T
    z = out[input_dim:input_dim + latent_dim].T
    return x_recon, z


# ----------------------------------------------------------------------------
# Parameter construction (deterministic, mirrors nn.Linear: W (out,in), b (out,))
# ----------------------------------------------------------------------------
def _init_linear_params(key, d_in, d_out, dtype=jnp.float32):
    kw, kb = jax.random.split(key)
    bound = float(d_in) ** -0.5
    w = jax.random.uniform(kw, (d_out, d_in), dtype, -bound, bound)
    b = jax.random.uniform(kb, (d_out,), dtype, -bound, bound)
    return w, b


def make_autoencoder_params(key, input_dim, latent_dim, size_hidden_layers,
                            dtype=jnp.float32):
    """{'encoder': [(W, b, relu)...], 'decoder': [(W, b, relu)...]}.
    Use dtype=jnp.bfloat16 on v6e/v7x to halve weight bytes (activations and
    accumulation stay f32 in the kernel)."""
    enc_dims = [input_dim] + list(size_hidden_layers) + [latent_dim]
    dec_dims = [latent_dim] + list(reversed(size_hidden_layers)) + [input_dim]

    params = {"encoder": [], "decoder": []}
    for name, dims in (("encoder", enc_dims), ("decoder", dec_dims)):
        for i in range(len(dims) - 1):
            key, sub = jax.random.split(key)
            w, b = _init_linear_params(sub, dims[i], dims[i + 1], dtype)
            apply_relu = i < len(dims) - 2   # ReLU after all but the last layer
            params[name].append((w, b, apply_relu))
    return params


# Pure-JAX reference (full-precision f32 matmuls) for the self-test.
def _reference_forward(params, x):
    h = x
    for (w, b, relu) in params["encoder"]:
        h = jnp.dot(h, w.T, precision=jax.lax.Precision.HIGHEST) + b
        if relu:
            h = jnp.maximum(h, 0.0)
    z = h
    for (w, b, relu) in params["decoder"]:
        h = jnp.dot(h, w.T, precision=jax.lax.Precision.HIGHEST) + b
        if relu:
            h = jnp.maximum(h, 0.0)
    return h, z


if __name__ == "__main__":
    input_dim = 64
    latent_dim = 8
    size_hidden_layers = [32, 16]
    batch = 256          # single 256-wide lane tile -> one grid step

    key = jax.random.PRNGKey(0)
    kp, kx = jax.random.split(key)

    params = make_autoencoder_params(kp, input_dim, latent_dim,
                                     size_hidden_layers, dtype=jnp.float32)
    packed = pack_autoencoder_params(params)
    x = jax.random.normal(kx, (batch, input_dim), jnp.float32)

    x_recon, z = autoencoder_mlp_forward(packed, x, block_m=256)
    jax.block_until_ready((x_recon, z))

    x_ref_out, z_ref_out = _reference_forward(params, x)
    assert x_recon.shape == (batch, input_dim)
    assert z.shape == (batch, latent_dim)
    # f32 params/IO in the demo -> tight tolerance (loosen if params are bf16).
    assert jnp.allclose(z, z_ref_out, atol=1e-4, rtol=1e-4)
    assert jnp.allclose(x_recon, x_ref_out, atol=1e-4, rtol=1e-4)

    print("KERNEL_OK")
</pallas_src>

<mosaic_0001>
module attributes {stable_mosaic.version = 11 : i64} {
  func.func @_fused_ae_kernel(%arg0: i32, %arg1: memref<256x64xf32, #tpu.memory_space<vmem>>, %arg2: memref<6x64x64xf32, #tpu.memory_space<vmem>>, %arg3: memref<6x64x1xf32, #tpu.memory_space<vmem>>, %arg4: memref<72x256xf32, #tpu.memory_space<vmem>>) attributes {dimension_semantics = [#tpu.dimension_semantics<parallel>], iteration_bounds = array<i64: 1>, scalar_prefetch = 0 : i64, scratch_operands = 0 : i64, tpu.core_type = #tpu.core_type<tc>, window_params = [{transform_indices = @transform_0, window_bounds = array<i64: 256, 64>}, {pipeline_mode = #tpu.pipeline_mode<synchronous>, transform_indices = @transform_1, window_bounds = array<i64: 6, 64, 64>}, {pipeline_mode = #tpu.pipeline_mode<synchronous>, transform_indices = @transform_2, window_bounds = array<i64: 6, 64, 1>}, {transform_indices = @transform_3, window_bounds = array<i64: 72, 256>}]} {
    %c0 = arith.constant 0 : index
    %c0_0 = arith.constant 0 : index
    %0 = vector.load %arg1[%c0, %c0_0] : memref<256x64xf32, #tpu.memory_space<vmem>>, vector<256x64xf32>
    %c0_1 = arith.constant 0 : index
    %c0_2 = arith.constant 0 : index
    %c0_3 = arith.constant 0 : index
    %1 = vector.load %arg2[%c0_1, %c0_2, %c0_3] : memref<6x64x64xf32, #tpu.memory_space<vmem>>, vector<1x64x64xf32>
    %2 = vector.shape_cast %1 : vector<1x64x64xf32> to vector<64x64xf32>
    %c0_4 = arith.constant 0 : index
    %c0_5 = arith.constant 0 : index
    %c0_6 = arith.constant 0 : index
    %3 = vector.load %arg3[%c0_4, %c0_5, %c0_6] : memref<6x64x1xf32, #tpu.memory_space<vmem>>, vector<1x64x1xf32>
    %4 = vector.shape_cast %3 : vector<1x64x1xf32> to vector<64x1xf32>
    %cst = arith.constant dense<0.000000e+00> : vector<64x256xf32>
    %5 = tpu.matmul %2, %0, %cst {dimension_numbers = #tpu.dot_dimension_numbers<[1], [1], [0], [0], [0, 0, 1, 0], [], []>} : vector<64x64xf32>, vector<256x64xf32>, vector<64x256xf32> -> vector<64x256xf32>
    %6 = vector.broadcast %4 : vector<64x1xf32> to vector<64x256xf32>
    %7 = arith.addf %5, %6 : vector<64x256xf32>
    %cst_7 = arith.constant 0.000000e+00 : f32
    %8 = vector.broadcast %cst_7 : f32 to vector<64x256xf32>
    %9 = arith.maximumf %7, %8 : vector<64x256xf32>
    %c1 = arith.constant 1 : index
    %c0_8 = arith.constant 0 : index
    %c0_9 = arith.constant 0 : index
    %10 = vector.load %arg2[%c1, %c0_8, %c0_9] : memref<6x64x64xf32, #tpu.memory_space<vmem>>, vector<1x64x64xf32>
    %11 = vector.shape_cast %10 : vector<1x64x64xf32> to vector<64x64xf32>
    %c1_10 = arith.constant 1 : index
    %c0_11 = arith.constant 0 : index
    %c0_12 = arith.constant 0 : index
    %12 = vector.load %arg3[%c1_10, %c0_11, %c0_12] : memref<6x64x1xf32, #tpu.memory_space<vmem>>, vector<1x64x1xf32>
    %13 = vector.shape_cast %12 : vector<1x64x1xf32> to vector<64x1xf32>
    %cst_13 = arith.constant dense<0.000000e+00> : vector<64x256xf32>
    %14 = tpu.matmul %11, %9, %cst_13 {dimension_numbers = #tpu.dot_dimension_numbers<[1], [0], [0], [1], [0, 0, 1, 1], [], []>} : vector<64x64xf32>, vector<64x256xf32>, vector<64x256xf32> -> vector<64x256xf32>
    %15 = vector.broadcast %13 : vector<64x1xf32> to vector<64x256xf32>
    %16 = arith.addf %14, %15 : vector<64x256xf32>
    %cst_14 = arith.constant 0.000000e+00 : f32
    %17 = vector.broadcast %cst_14 : f32 to vector<64x256xf32>
    %18 = arith.maximumf %16, %17 : vector<64x256xf32>
    %c2 = arith.constant 2 : index
    %c0_15 = arith.constant 0 : index
    %c0_16 = arith.constant 0 : index
    %19 = vector.load %arg2[%c2, %c0_15, %c0_16] : memref<6x64x64xf32, #tpu.memory_space<vmem>>, vector<1x64x64xf32>
    %20 = vector.shape_cast %19 : vector<1x64x64xf32> to vector<64x64xf32>
    %c2_17 = arith.constant 2 : index
    %c0_18 = arith.constant 0 : index
    %c0_19 = arith.constant 0 : index
    %21 = vector.load %arg3[%c2_17, %c0_18, %c0_19] : memref<6x64x1xf32, #tpu.memory_space<vmem>>, vector<1x64x1xf32>
    %22 = vector.shape_cast %21 : vector<1x64x1xf32> to vector<64x1xf32>
    %cst_20 = arith.constant dense<0.000000e+00> : vector<64x256xf32>
    %23 = tpu.matmul %20, %18, %cst_20 {dimension_numbers = #tpu.dot_dimension_numbers<[1], [0], [0], [1], [0, 0, 1, 1], [], []>} : vector<64x64xf32>, vector<64x256xf32>, vector<64x256xf32> -> vector<64x256xf32>
    %24 = vector.broadcast %22 : vector<64x1xf32> to vector<64x256xf32>
    %25 = arith.addf %23, %24 : vector<64x256xf32>
    %26 = vector.extract_strided_slice %25 {offsets = [0, 0], sizes = [8, 256], strides = [1, 1]} : vector<64x256xf32> to vector<8x256xf32>
    %c64 = arith.constant 64 : index
    %c0_21 = arith.constant 0 : index
    %27 = vector.load %arg4[%c64, %c0_21] : memref<72x256xf32, #tpu.memory_space<vmem>>, vector<8x256xf32>
    tpu.vector_store %arg4[%c64, %c0_21], %26 {strides = array<i32>} : memref<72x256xf32, #tpu.memory_space<vmem>>, vector<8x256xf32>,
    %c3 = arith.constant 3 : index
    %c0_22 = arith.constant 0 : index
    %c0_23 = arith.constant 0 : index
    %28 = vector.load %arg2[%c3, %c0_22, %c0_23] : memref<6x64x64xf32, #tpu.memory_space<vmem>>, vector<1x64x64xf32>
    %29 = vector.shape_cast %28 : vector<1x64x64xf32> to vector<64x64xf32>
    %c3_24 = arith.constant 3 : index
    %c0_25 = arith.constant 0 : index
    %c0_26 = arith.constant 0 : index
    %30 = vector.load %arg3[%c3_24, %c0_25, %c0_26] : memref<6x64x1xf32, #tpu.memory_space<vmem>>, vector<1x64x1xf32>
    %31 = vector.shape_cast %30 : vector<1x64x1xf32> to vector<64x1xf32>
    %cst_27 = arith.constant dense<0.000000e+00> : vector<64x256xf32>
    %32 = tpu.matmul %29, %25, %cst_27 {dimension_numbers = #tpu.dot_dimension_numbers<[1], [0], [0], [1], [0, 0, 1, 1], [], []>} : vector<64x64xf32>, vector<64x256xf32>, vector<64x256xf32> -> vector<64x256xf32>
    %33 = vector.broadcast %31 : vector<64x1xf32> to vector<64x256xf32>
    %34 = arith.addf %32, %33 : vector<64x256xf32>
    %cst_28 = arith.constant 0.000000e+00 : f32
    %35 = vector.broadcast %cst_28 : f32 to vector<64x256xf32>
    %36 = arith.maximumf %34, %35 : vector<64x256xf32>
    %c4 = arith.constant 4 : index
    %c0_29 = arith.constant 0 : index
    %c0_30 = arith.constant 0 : index
    %37 = vector.load %arg2[%c4, %c0_29, %c0_30] : memref<6x64x64xf32, #tpu.memory_space<vmem>>, vector<1x64x64xf32>
    %38 = vector.shape_cast %37 : vector<1x64x64xf32> to vector<64x64xf32>
    %c4_31 = arith.constant 4 : index
    %c0_32 = arith.constant 0 : index
    %c0_33 = arith.constant 0 : index
    %39 = vector.load %arg3[%c4_31, %c0_32, %c0_33] : memref<6x64x1xf32, #tpu.memory_space<vmem>>, vector<1x64x1xf32>
    %40 = vector.shape_cast %39 : vector<1x64x1xf32> to vector<64x1xf32>
    %cst_34 = arith.constant dense<0.000000e+00> : vector<64x256xf32>
    %41 = tpu.matmul %38, %36, %cst_34 {dimension_numbers = #tpu.dot_dimension_numbers<[1], [0], [0], [1], [0, 0, 1, 1], [], []>} : vector<64x64xf32>, vector<64x256xf32>, vector<64x256xf32> -> vector<64x256xf32>
    %42 = vector.broadcast %40 : vector<64x1xf32> to vector<64x256xf32>
    %43 = arith.addf %41, %42 : vector<64x256xf32>
    %cst_35 = arith.constant 0.000000e+00 : f32
    %44 = vector.broadcast %cst_35 : f32 to vector<64x256xf32>
    %45 = arith.maximumf %43, %44 : vector<64x256xf32>
    %c5 = arith.constant 5 : index
    %c0_36 = arith.constant 0 : index
    %c0_37 = arith.constant 0 : index
    %46 = vector.load %arg2[%c5, %c0_36, %c0_37] : memref<6x64x64xf32, #tpu.memory_space<vmem>>, vector<1x64x64xf32>
    %47 = vector.shape_cast %46 : vector<1x64x64xf32> to vector<64x64xf32>
    %c5_38 = arith.constant 5 : index
    %c0_39 = arith.constant 0 : index
    %c0_40 = arith.constant 0 : index
    %48 = vector.load %arg3[%c5_38, %c0_39, %c0_40] : memref<6x64x1xf32, #tpu.memory_space<vmem>>, vector<1x64x1xf32>
    %49 = vector.shape_cast %48 : vector<1x64x1xf32> to vector<64x1xf32>
    %cst_41 = arith.constant dense<0.000000e+00> : vector<64x256xf32>
    %50 = tpu.matmul %47, %45, %cst_41 {dimension_numbers = #tpu.dot_dimension_numbers<[1], [0], [0], [1], [0, 0, 1, 1], [], []>} : vector<64x64xf32>, vector<64x256xf32>, vector<64x256xf32> -> vector<64x256xf32>
    %51 = vector.broadcast %49 : vector<64x1xf32> to vector<64x256xf32>
    %52 = arith.addf %50, %51 : vector<64x256xf32>
    %c0_42 = arith.constant 0 : index
    %c0_43 = arith.constant 0 : index
    %53 = vector.load %arg4[%c0_42, %c0_43] : memref<72x256xf32, #tpu.memory_space<vmem>>, vector<64x256xf32>
    tpu.vector_store %arg4[%c0_42, %c0_43], %52 {strides = array<i32>} : memref<72x256xf32, #tpu.memory_space<vmem>>, vector<64x256xf32>,
    return
  }
  func.func @transform_0(%arg0: i32) -> (i32, i32) {
    %c0_i32 = arith.constant 0 : i32
    %c0_i32_0 = arith.constant 0 : i32
    return %arg0, %c0_i32 : i32, i32
  }
  func.func @transform_1(%arg0: i32) -> (i32, i32, i32) {
    %c0_i32 = arith.constant 0 : i32
    %c0_i32_0 = arith.constant 0 : i32
    %c0_i32_1 = arith.constant 0 : i32
    %c0_i32_2 = arith.constant 0 : i32
    return %c0_i32, %c0_i32_0, %c0_i32_1 : i32, i32, i32
  }
  func.func @transform_2(%arg0: i32) -> (i32, i32, i32) {
    %c0_i32 = arith.constant 0 : i32
    %c0_i32_0 = arith.constant 0 : i32
    %c0_i32_1 = arith.constant 0 : i32
    %c0_i32_2 = arith.constant 0 : i32
    return %c0_i32, %c0_i32_0, %c0_i32_1 : i32, i32, i32
  }
  func.func @transform_3(%arg0: i32) -> (i32, i32) {
    %c0_i32 = arith.constant 0 : i32
    %c0_i32_0 = arith.constant 0 : i32
    return %c0_i32, %arg0 : i32, i32
  }
}

</mosaic_0001>

<llo_original>
// kernel: tpu_custom_call.1
$region0: #{tpu_custom_call.1}
  #allocation0 [shape = 'u32[]', space=smem, size = 0x4, offset = 0x4, fixed_abs, tag = 'smem constant byte address 0x4 - core index']
  #allocation1 [shape = 'u32[144,128]{1,0:T(1,128)}', space=vmem, size = 0x12000, scoped, tag = 'internal scratch']
  %s0 = inlined_call_operand.vmem [shape: f32[256,64], index: 0, kind: input, shape index: {}]
  %s1 = inlined_call_operand.vmem [shape: f32[6,64,64], index: 1, kind: input, shape index: {}]
  %s2 = inlined_call_operand.vmem [shape: f32[6,64,1], index: 2, kind: input, shape index: {}]
  %s3 = inlined_call_operand.hbm [shape: f32[72,256], index: 3, kind: output, shape index: {}]
  %s4 = sld [smem:[#allocation0]]
  $region22: #{tpu_custom_call.1} parent=0
    _
  %s6 = ssub.s32 1, %s4
  %s7 = scalar_select 0, %s6, %s4
  $region1: #{tpu_custom_call.1} parent=0
    #allocation2 [shape = 'u8[73728]{0}', space=vmem, size = 0x12000, scoped, tag = 'output window, operand 0, single buffered']
    #allocation3 [shape = 's32[1]{0}', space=sflag, size = 0x4, scoped, tag = 'scoped memory for tpu_custom_call.1']
    %8 = vsyncpa [#allocation3], 0
    // Predicated region
    $region2: #{tpu_custom_call.1} parent=1 // pred_check
      _
    $region3: #{tpu_custom_call.1} parent=1 // pred_check_branch
      %10 = sbr.rel (0) target = $region5
    $region4: #{tpu_custom_call.1} parent=1 // pred_region
      _
    $region5: #{tpu_custom_call.1} parent=1 // pred_fallthru
      _
    // Predicated region
    $region6: #{tpu_custom_call.1} parent=1 // pred_check
      _
    $region7: #{tpu_custom_call.1} parent=1 // pred_check_branch
      %12 = sbr.rel (0) target = $region9
    $region8: #{tpu_custom_call.1} parent=1 // pred_region
      _
    $region9: #{tpu_custom_call.1} parent=1 // pred_fallthru
      _
    // Predicated region
    $region10: #{tpu_custom_call.1} parent=1 // pred_check
      _
    $region11: #{tpu_custom_call.1} parent=1 // pred_check_branch
      %14 = sbr.rel (0) target = $region13
    $region12: #{tpu_custom_call.1} parent=1 // pred_region
      _
    $region13: #{tpu_custom_call.1} parent=1 // pred_fallthru
      _
    %v15 = vld [vmem:[%s0] sm:$0xff]
    %v16 = vld [vmem:[%s0 + $0x8] sm:$0xff]
    %v17 = vld [vmem:[%s0 + $0x10] sm:$0xff]
    %v18 = vld [vmem:[%s0 + $0x18] sm:$0xff]
    %v19 = vld [vmem:[%s0 + $0x20] sm:$0xff]
    %v20 = vld [vmem:[%s0 + $0x28] sm:$0xff]
    %v21 = vld [vmem:[%s0 + $0x30] sm:$0xff]
    %v22 = vld [vmem:[%s0 + $0x38] sm:$0xff]
    %v23 = vld [vmem:[%s0 + $0x40] sm:$0xff]
    %v24 = vld [vmem:[%s0 + $0x48] sm:$0xff]
    %v25 = vld [vmem:[%s0 + $0x50] sm:$0xff]
    %v26 = vld [vmem:[%s0 + $0x58] sm:$0xff]
    %v27 = vld [vmem:[%s0 + $0x60] sm:$0xff]
    %v28 = vld [vmem:[%s0 + $0x68] sm:$0xff]
    %v29 = vld [vmem:[%s0 + $0x70] sm:$0xff]
    %v30 = vld [vmem:[%s0 + $0x78] sm:$0xff]
    %v31 = vld [vmem:[%s0 + $0x80] sm:$0xff]
    %v32 = vld [vmem:[%s0 + $0x88] sm:$0xff]
    %v33 = vld [vmem:[%s0 + $0x90] sm:$0xff]
    %v34 = vld [vmem:[%s0 + $0x98] sm:$0xff]
    %v35 = vld [vmem:[%s0 + $0xa0] sm:$0xff]
    %v36 = vld [vmem:[%s0 + $0xa8] sm:$0xff]
    %v37 = vld [vmem:[%s0 + $0xb0] sm:$0xff]
    %v38 = vld [vmem:[%s0 + $0xb8] sm:$0xff]
    %v39 = vld [vmem:[%s0 + $0xc0] sm:$0xff]
    %v40 = vld [vmem:[%s0 + $0xc8] sm:$0xff]
    %v41 = vld [vmem:[%s0 + $0xd0] sm:$0xff]
    %v42 = vld [vmem:[%s0 + $0xd8] sm:$0xff]
    %v43 = vld [vmem:[%s0 + $0xe0] sm:$0xff]
    %v44 = vld [vmem:[%s0 + $0xe8] sm:$0xff]
    %v45 = vld [vmem:[%s0 + $0xf0] sm:$0xff]
    %v46 = vld [vmem:[%s0 + $0xf8] sm:$0xff]
    %v47 = vld [vmem:[%s1] sm:$0xff]
    %v48 = vld [vmem:[%s1 + $0x8] sm:$0xff]
    %v49 = vld [vmem:[%s1 + $0x10] sm:$0xff]
    %v50 = vld [vmem:[%s1 + $0x18] sm:$0xff]
    %v51 = vld [vmem:[%s1 + $0x20] sm:$0xff]
    %v52 = vld [vmem:[%s1 + $0x28] sm:$0xff]
    %v53 = vld [vmem:[%s1 + $0x30] sm:$0xff]
    %v54 = vld [vmem:[%s1 + $0x38] sm:$0xff]
    %v55 = vld [vmem:[%s2] sm:$0xff]
    %v56 = vld [vmem:[%s2 + $0x8] sm:$0xff]
    %v57 = vld [vmem:[%s2 + $0x10] sm:$0xff]
    %v58 = vld [vmem:[%s2 + $0x18] sm:$0xff]
    %v59 = vld [vmem:[%s2 + $0x20] sm:$0xff]
    %v60 = vld [vmem:[%s2 + $0x28] sm:$0xff]
    %v61 = vld [vmem:[%s2 + $0x30] sm:$0xff]
    %v62 = vld [vmem:[%s2 + $0x38] sm:$0xff]
    %64 = vset.pattern.permute.xlu0 0
    %65 = vperm.xlu0 %64, %v55
    %v66 = vpop.permute.xlu0 %65
    %69 = vset.pattern.permute.xlu0 0
    %70 = vperm.xlu0 %69, %v56
    %v71 = vpop.permute.xlu0 %70
    %74 = vset.pattern.permute.xlu0 0
    %75 = vperm.xlu0 %74, %v57
    %v76 = vpop.permute.xlu0 %75
    %79 = vset.pattern.permute.xlu0 0
    %80 = vperm.xlu0 %79, %v58
    %v81 = vpop.permute.xlu0 %80
    %84 = vset.pattern.permute.xlu0 0
    %85 = vperm.xlu0 %84, %v59
    %v86 = vpop.permute.xlu0 %85
    %89 = vset.pattern.permute.xlu0 0
    %90 = vperm.xlu0 %89, %v60
    %v91 = vpop.permute.xlu0 %90
    %94 = vset.pattern.permute.xlu0 0
    %95 = vperm.xlu0 %94, %v61
    %v96 = vpop.permute.xlu0 %95
    %99 = vset.pattern.permute.xlu0 0
    %100 = vperm.xlu0 %99, %v62
    %v101 = vpop.permute.xlu0 %100
    %vm103 = vcmask 523264
    %v105 = vsel %vm103, %v47, 0
    %v108 = vsel %vm103, %v48, 0
    %v111 = vsel %vm103, %v49, 0
    %v114 = vsel %vm103, %v50, 0
    %v117 = vsel %vm103, %v51, 0
    %v120 = vsel %vm103, %v52, 0
    %v123 = vsel %vm103, %v53, 0
    %v126 = vsel %vm103, %v54, 0
    %v129 = vsel %vm103, %v15, 0
    %v132 = vsel %vm103, %v16, 0
    %v135 = vsel %vm103, %v17, 0
    %v138 = vsel %vm103, %v18, 0
    %v141 = vsel %vm103, %v19, 0
    %v144 = vsel %vm103, %v20, 0
    %v147 = vsel %vm103, %v21, 0
    %v150 = vsel %vm103, %v22, 0
    %v153 = vsel %vm103, %v23, 0
    %v156 = vsel %vm103, %v24, 0
    %v159 = vsel %vm103, %v25, 0
    %v162 = vsel %vm103, %v26, 0
    %v165 = vsel %vm103, %v27, 0
    %v168 = vsel %vm103, %v28, 0
    %v171 = vsel %vm103, %v29, 0
    %v174 = vsel %vm103, %v30, 0
    %v177 = vsel %vm103, %v31, 0
    %v180 = vsel %vm103, %v32, 0
    %v183 = vsel %vm103, %v33, 0
    %v186 = vsel %vm103, %v34, 0
    %v189 = vsel %vm103, %v35, 0
    %v192 = vsel %vm103, %v36, 0
    %v195 = vsel %vm103, %v37, 0
    %v198 = vsel %vm103, %v38, 0
    %v201 = vsel %vm103, %v39, 0
    %v204 = vsel %vm103, %v40, 0
    %v207 = vsel %vm103, %v41, 0
    %v210 = vsel %vm103, %v42, 0
    %v213 = vsel %vm103, %v43, 0
    %v216 = vsel %vm103, %v44, 0
    %v219 = vsel %vm103, %v45, 0
    %v222 = vsel %vm103, %v46, 0
    %224 = vmatprep.subr.mxu0 0.0
    %225 = vmatpush1.xpose.msra.mxu0 %v129
    %226 = vmatprep.subr.mxu0 0.0
    %227 = vmatpush1.xpose.msra.mxu0 %v132
    %228 = vmatprep.subr.mxu0 0.0
    %229 = vmatpush1.xpose.msra.mxu0 %v135
    %230 = vmatprep.subr.mxu0 0.0
    %231 = vmatpush1.xpose.msra.mxu0 %v138
    %232 = vmatprep.subr.mxu0 0.0
    %233 = vmatpush1.xpose.msra.mxu0 %v141
    %234 = vmatprep.subr.mxu0 0.0
    %235 = vmatpush1.xpose.msra.mxu0 %v144
    %236 = vmatprep.subr.mxu0 0.0
    %237 = vmatpush1.xpose.msra.mxu0 %v147
    %238 = vmatprep.subr.mxu0 0.0
    %239 = vmatpush1.xpose.msra.mxu0 %v150
    %240 = vmatprep.subr.mxu0 0.0
    %241 = vmatpush1.xpose.msra.mxu0 %v153
    %242 = vmatprep.subr.mxu0 0.0
    %243 = vmatpush1.xpose.msra.mxu0 %v156
    %244 = vmatprep.subr.mxu0 0.0
    %245 = vmatpush1.xpose.msra.mxu0 %v159
    %246 = vmatprep.subr.mxu0 0.0
    %247 = vmatpush1.xpose.msra.mxu0 %v162
    %248 = vmatprep.subr.mxu0 0.0
    %249 = vmatpush1.xpose.msra.mxu0 %v165
    %250 = vmatprep.subr.mxu0 0.0
    %251 = vmatpush1.xpose.msra.mxu0 %v168
    %252 = vmatprep.subr.mxu0 0.0
    %253 = vmatpush1.xpose.msra.mxu0 %v171
    %254 = vmatprep.subr.mxu0 0.0
    %255 = vmatpush1.xpose.msra.mxu0 %v174
    %256 = vmatprep.subr.mxu0 0.0
    %257 = vmatpush1.xpose.msra.mxu0 %v177
    %258 = vmatprep.subr.mxu0 0.0
    %259 = vmatpush1.xpose.msra.mxu0 %v180
    %260 = vmatprep.subr.mxu0 0.0
    %261 = vmatpush1.xpose.msra.mxu0 %v183
    %262 = vmatprep.subr.mxu0 0.0
    %263 = vmatpush1.xpose.msra.mxu0 %v186
    %264 = vmatprep.subr.mxu0 0.0
    %265 = vmatpush1.xpose.msra.mxu0 %v189
    %266 = vmatprep.subr.mxu0 0.0
    %267 = vmatpush1.xpose.msra.mxu0 %v192
    %268 = vmatprep.subr.mxu0 0.0
    %269 = vmatpush1.xpose.msra.mxu0 %v195
    %270 = vmatprep.subr.mxu0 0.0
    %271 = vmatpush1.xpose.msra.mxu0 %v198
    %272 = vmatprep.subr.mxu0 0.0
    %273 = vmatpush1.xpose.msra.mxu0 %v201
    %274 = vmatprep.subr.mxu0 0.0
    %275 = vmatpush1.xpose.msra.mxu0 %v204
    %276 = vmatprep.subr.mxu0 0.0
    %277 = vmatpush1.xpose.msra.mxu0 %v207
    %278 = vmatprep.subr.mxu0 0.0
    %279 = vmatpush1.xpose.msra.mxu0 %v210
    %280 = vmatprep.subr.mxu0 0.0
    %281 = vmatpush1.xpose.msra.mxu0 %v213
    %282 = vmatprep.subr.mxu0 0.0
    %283 = vmatpush1.xpose.msra.mxu0 %v216
    %284 = vmatprep.subr.mxu0 0.0
    %285 = vmatpush1.xpose.msra.mxu0 %v219
    %286 = vmatprep.subr.mxu0 0.0
    %287 = vmatpush1.xpose.msra.mxu0 %v222
    %288 = vmatprep.mubr.f32.mxu0 0.0
    %289 = vmatmul.mubr.f32.gmra.mrb[0].mxu0 %v105
    %v290 = vpop.f32.mrb[0].mxu0
    %v291 = vadd.f32 %v66, %v290
    %v292 = vpop.f32.mrb[0].mxu0
    %v293 = vadd.f32 %v66, %v292
    %294 = vmatprep.mubr.f32.mxu0 0.0
    %295 = vmatmul.mubr.f32.gmra.mrb[0].mxu0 %v108
    %v296 = vpop.f32.mrb[0].mxu0
    %v297 = vadd.f32 %v71, %v296
    %v298 = vpop.f32.mrb[0].mxu0
    %v299 = vadd.f32 %v71, %v298
    %300 = vmatprep.mubr.f32.mxu0 0.0
    %301 = vmatmul.mubr.f32.gmra.mrb[0].mxu0 %v111
    %v302 = vpop.f32.mrb[0].mxu0
    %v303 = vadd.f32 %v76, %v302
    %v304 = vpop.f32.mrb[0].mxu0
    %v305 = vadd.f32 %v76, %v304
    %306 = vmatprep.mubr.f32.mxu0 0.0
    %307 = vmatmul.mubr.f32.gmra.mrb[0].mxu0 %v114
    %v308 = vpop.f32.mrb[0].mxu0
    %v309 = vadd.f32 %v81, %v308
    %v310 = vpop.f32.mrb[0].mxu0
    %v311 = vadd.f32 %v81, %v310
    %312 = vmatprep.mubr.f32.mxu0 0.0
    %313 = vmatmul.mubr.f32.gmra.mrb[0].mxu0 %v117
    %v314 = vpop.f32.mrb[0].mxu0
    %v315 = vadd.f32 %v86, %v314
    %v316 = vpop.f32.mrb[0].mxu0
    %v317 = vadd.f32 %v86, %v316
    %318 = vmatprep.mubr.f32.mxu0 0.0
    %319 = vmatmul.mubr.f32.gmra.mrb[0].mxu0 %v120
    %v320 = vpop.f32.mrb[0].mxu0
    %v321 = vadd.f32 %v91, %v320
    %v322 = vpop.f32.mrb[0].mxu0
    %v323 = vadd.f32 %v91, %v322
    %324 = vmatprep.mubr.f32.mxu0 0.0
    %325 = vmatmul.mubr.f32.gmra.mrb[0].mxu0 %v123
    %v326 = vpop.f32.mrb[0].mxu0
    %v327 = vadd.f32 %v96, %v326
    %v328 = vpop.f32.mrb[0].mxu0
    %v329 = vadd.f32 %v96, %v328
    %330 = vmatprep.mubr.f32.mxu0 0.0
    %331 = vmatmul.mubr.f32.gmra.mrb[0].mxu0 %v126
    %v332 = vpop.f32.mrb[0].mxu0
    %v333 = vadd.f32 %v101, %v332
    %v334 = vpop.f32.mrb[0].mxu0
    %v335 = vadd.f32 %v101, %v334
    %336 = vdwg.mxu0
    %v337 = vmax.f32 %v291, 0.0
    %v338 = vmax.f32 %v293, 0.0
    %v339 = vmax.f32 %v297, 0.0
    %v340 = vmax.f32 %v299, 0.0
    %v341 = vmax.f32 %v303, 0.0
    %v342 = vmax.f32 %v305, 0.0
    %v343 = vmax.f32 %v309, 0.0
    %v344 = vmax.f32 %v311, 0.0
    %v345 = vmax.f32 %v315, 0.0
    %v346 = vmax.f32 %v317, 0.0
    %v347 = vmax.f32 %v321, 0.0
    %v348 = vmax.f32 %v323, 0.0
    %v349 = vmax.f32 %v327, 0.0
    %v350 = vmax.f32 %v329, 0.0
    %v351 = vmax.f32 %v333, 0.0
    %v352 = vmax.f32 %v335, 0.0
    %s353 = scalar_lea.vmem %s1, 64
    %v354 = vld [vmem:[%s353] sm:$0xff]
    %v355 = vld [vmem:[%s353 + $0x8] sm:$0xff]
    %v356 = vld [vmem:[%s353 + $0x10] sm:$0xff]
    %v357 = vld [vmem:[%s353 + $0x18] sm:$0xff]
    %v358 = vld [vmem:[%s353 + $0x20] sm:$0xff]
    %v359 = vld [vmem:[%s353 + $0x28] sm:$0xff]
    %v360 = vld [vmem:[%s353 + $0x30] sm:$0xff]
    %v361 = vld [vmem:[%s353 + $0x38] sm:$0xff]
    %s362 = scalar_lea.vmem %s2, 64
    %v363 = vld [vmem:[%s362] sm:$0xff]
    %v364 = vld [vmem:[%s362 + $0x8] sm:$0xff]
    %v365 = vld [vmem:[%s362 + $0x10] sm:$0xff]
    %v366 = vld [vmem:[%s362 + $0x18] sm:$0xff]
    %v367 = vld [vmem:[%s362 + $0x20] sm:$0xff]
    %v368 = vld [vmem:[%s362 + $0x28] sm:$0xff]
    %v369 = vld [vmem:[%s362 + $0x30] sm:$0xff]
    %v370 = vld [vmem:[%s362 + $0x38] sm:$0xff]
    %372 = vset.pattern.permute.xlu0 0
    %373 = vperm.xlu0 %372, %v363
    %v374 = vpop.permute.xlu0 %373
    %377 = vset.pattern.permute.xlu0 0
    %378 = vperm.xlu0 %377, %v364
    %v379 = vpop.permute.xlu0 %378
    %382 = vset.pattern.permute.xlu0 0
    %383 = vperm.xlu0 %382, %v365
    %v384 = vpop.permute.xlu0 %383
    %387 = vset.pattern.permute.xlu0 0
    %388 = vperm.xlu0 %387, %v366
    %v389 = vpop.permute.xlu0 %388
    %392 = vset.pattern.permute.xlu0 0
    %393 = vperm.xlu0 %392, %v367
    %v394 = vpop.permute.xlu0 %393
    %397 = vset.pattern.permute.xlu0 0
    %398 = vperm.xlu0 %397, %v368
    %v399 = vpop.permute.xlu0 %398
    %402 = vset.pattern.permute.xlu0 0
    %403 = vperm.xlu0 %402, %v369
    %v404 = vpop.permute.xlu0 %403
    %407 = vset.pattern.permute.xlu0 0
    %408 = vperm.xlu0 %407, %v370
    %v409 = vpop.permute.xlu0 %408
    %v412 = vsel %vm103, %v354, 0
    %v415 = vsel %vm103, %v355, 0
    %v418 = vsel %vm103, %v356, 0
    %v421 = vsel %vm103, %v357, 0
    %v424 = vsel %vm103, %v358, 0
    %v427 = vsel %vm103, %v359, 0
    %v430 = vsel %vm103, %v360, 0
    %v433 = vsel %vm103, %v361, 0
    %435 = vmatprep.subr.mxu0 %v338
    %436 = vmatpush1.msra.mxu0 %v337
    %437 = vmatprep.subr.mxu0 %v340
    %438 = vmatpush1.msra.mxu0 %v339
    %439 = vmatprep.subr.mxu0 %v342
    %440 = vmatpush1.msra.mxu0 %v341
    %441 = vmatprep.subr.mxu0 %v344
    %442 = vmatpush1.msra.mxu0 %v343
    %443 = vmatprep.subr.mxu0 %v346
    %444 = vmatpush1.msra.mxu0 %v345
    %445 = vmatprep.subr.mxu0 %v348
    %446 = vmatpush1.msra.mxu0 %v347
    %447 = vmatprep.subr.mxu0 %v350
    %448 = vmatpush1.msra.mxu0 %v349
    %449 = vmatprep.subr.mxu0 %v352
    %450 = vmatpush1.msra.mxu0 %v351
    %451 = vmatprep.subr.mxu0 0.0
    %452 = vmatpush1.msra.mxu0 0.0
    %453 = vmatprep.subr.mxu0 0.0
    %454 = vmatpush1.msra.mxu0 0.0
    %455 = vmatprep.subr.mxu0 0.0
    %456 = vmatpush1.msra.mxu0 0.0
    %457 = vmatprep.subr.mxu0 0.0
    %458 = vmatpush1.msra.mxu0 0.0
    %459 = vmatprep.subr.mxu0 0.0
    %460 = vmatpush1.msra.mxu0 0.0
    %461 = vmatprep.subr.mxu0 0.0
    %462 = vmatpush1.msra.mxu0 0.0
    %463 = vmatprep.subr.mxu0 0.0
    %464 = vmatpush1.msra.mxu0 0.0
    %465 = vmatprep.subr.mxu0 0.0
    %466 = vmatpush1.msra.mxu0 0.0
    %467 = vmatprep.subr.mxu0 0.0
    %468 = vmatpush1.msra.mxu0 0.0
    %469 = vmatprep.subr.mxu0 0.0
    %470 = vmatpush1.msra.mxu0 0.0
    %471 = vmatprep.subr.mxu0 0.0
    %472 = vmatpush1.msra.mxu0 0.0
    %473 = vmatprep.subr.mxu0 0.0
    %474 = vmatpush1.msra.mxu0 0.0
    %475 = vmatprep.subr.mxu0 0.0
    %476 = vmatpush1.msra.mxu0 0.0
    %477 = vmatprep.subr.mxu0 0.0
    %478 = vmatpush1.msra.mxu0 0.0
    %479 = vmatprep.subr.mxu0 0.0
    %480 = vmatpush1.msra.mxu0 0.0
    %481 = vmatprep.subr.mxu0 0.0
    %482 = vmatpush1.msra.mxu0 0.0
    %483 = vmatprep.subr.mxu0 0.0
    %484 = vmatpush1.msra.mxu0 0.0
    %485 = vmatprep.subr.mxu0 0.0
    %486 = vmatpush1.msra.mxu0 0.0
    %487 = vmatprep.subr.mxu0 0.0
    %488 = vmatpush1.msra.mxu0 0.0
    %489 = vmatprep.subr.mxu0 0.0
    %490 = vmatpush1.msra.mxu0 0.0
    %491 = vmatprep.subr.mxu0 0.0
    %492 = vmatpush1.msra.mxu0 0.0
    %493 = vmatprep.subr.mxu0 0.0
    %494 = vmatpush1.msra.mxu0 0.0
    %495 = vmatprep.subr.mxu0 0.0
    %496 = vmatpush1.msra.mxu0 0.0
    %497 = vmatprep.subr.mxu0 0.0
    %498 = vmatpush1.msra.mxu0 0.0
    %499 = vmatprep.mubr.f32.mxu0 0.0
    %500 = vmatmul.mubr.f32.gmra.mrb[0].mxu0 %v412
    %v501 = vpop.f32.mrb[0].mxu0
    %v502 = vadd.f32 %v374, %v501
    %v503 = vpop.f32.mrb[0].mxu0
    %v504 = vadd.f32 %v374, %v503
    %505 = vmatprep.mubr.f32.mxu0 0.0
    %506 = vmatmul.mubr.f32.gmra.mrb[0].mxu0 %v415
    %v507 = vpop.f32.mrb[0].mxu0
    %v508 = vadd.f32 %v379, %v507
    %v509 = vpop.f32.mrb[0].mxu0
    %v510 = vadd.f32 %v379, %v509
    %511 = vmatprep.mubr.f32.mxu0 0.0
    %512 = vmatmul.mubr.f32.gmra.mrb[0].mxu0 %v418
    %v513 = vpop.f32.mrb[0].mxu0
    %v514 = vadd.f32 %v384, %v513
    %v515 = vpop.f32.mrb[0].mxu0
    %v516 = vadd.f32 %v384, %v515
    %517 = vmatprep.mubr.f32.mxu0 0.0
    %518 = vmatmul.mubr.f32.gmra.mrb[0].mxu0 %v421
    %v519 = vpop.f32.mrb[0].mxu0
    %v520 = vadd.f32 %v389, %v519
    %v521 = vpop.f32.mrb[0].mxu0
    %v522 = vadd.f32 %v389, %v521
    %523 = vmatprep.mubr.f32.mxu0 0.0
    %524 = vmatmul.mubr.f32.gmra.mrb[0].mxu0 %v424
    %v525 = vpop.f32.mrb[0].mxu0
    %v526 = vadd.f32 %v394, %v525
    %v527 = vpop.f32.mrb[0].mxu0
    %v528 = vadd.f32 %v394, %v527
    %529 = vmatprep.mubr.f32.mxu0 0.0
    %530 = vmatmul.mubr.f32.gmra.mrb[0].mxu0 %v427
    %v531 = vpop.f32.mrb[0].mxu0
    %v532 = vadd.f32 %v399, %v531
    %v533 = vpop.f32.mrb[0].mxu0
    %v534 = vadd.f32 %v399, %v533
    %535 = vmatprep.mubr.f32.mxu0 0.0
    %536 = vmatmul.mubr.f32.gmra.mrb[0].mxu0 %v430
    %v537 = vpop.f32.mrb[0].mxu0
    %v538 = vadd.f32 %v404, %v537
    %v539 = vpop.f32.mrb[0].mxu0
    %v540 = vadd.f32 %v404, %v539
    %541 = vmatprep.mubr.f32.mxu0 0.0
    %542 = vmatmul.mubr.f32.gmra.mrb[0].mxu0 %v433
    %v543 = vpop.f32.mrb[0].mxu0
    %v544 = vadd.f32 %v409, %v543
    %v545 = vpop.f32.mrb[0].mxu0
    %v546 = vadd.f32 %v409, %v545
    %547 = vdwg.mxu0
    %v548 = vmax.f32 %v502, 0.0
    %v549 = vmax.f32 %v504, 0.0
    %v550 = vmax.f32 %v508, 0.0
    %v551 = vmax.f32 %v510, 0.0
    %v552 = vmax.f32 %v514, 0.0
    %v553 = vmax.f32 %v516, 0.0
    %v554 = vmax.f32 %v520, 0.0
    %v555 = vmax.f32 %v522, 0.0
    %v556 = vmax.f32 %v526, 0.0
    %v557 = vmax.f32 %v528, 0.0
    %v558 = vmax.f32 %v532, 0.0
    %v559 = vmax.f32 %v534, 0.0
    %v560 = vmax.f32 %v538, 0.0
    %v561 = vmax.f32 %v540, 0.0
    %v562 = vmax.f32 %v544, 0.0
    %v563 = vmax.f32 %v546, 0.0
    %s564 = scalar_lea.vmem %s1, 128
    %v565 = vld [vmem:[%s564] sm:$0xff]
    %v566 = vld [vmem:[%s564 + $0x8] sm:$0xff]
    %v567 = vld [vmem:[%s564 + $0x10] sm:$0xff]
    %v568 = vld [vmem:[%s564 + $0x18] sm:$0xff]
    %v569 = vld [vmem:[%s564 + $0x20] sm:$0xff]
    %v570 = vld [vmem:[%s564 + $0x28] sm:$0xff]
    %v571 = vld [vmem:[%s564 + $0x30] sm:$0xff]
    %v572 = vld [vmem:[%s564 + $0x38] sm:$0xff]
    %s573 = scalar_lea.vmem %s2, 128
    %v574 = vld [vmem:[%s573] sm:$0xff]
    %v575 = vld [vmem:[%s573 + $0x8] sm:$0xff]
    %v576 = vld [vmem:[%s573 + $0x10] sm:$0xff]
    %v577 = vld [vmem:[%s573 + $0x18] sm:$0xff]
    %v578 = vld [vmem:[%s573 + $0x20] sm:$0xff]
    %v579 = vld [vmem:[%s573 + $0x28] sm:$0xff]
    %v580 = vld [vmem:[%s573 + $0x30] sm:$0xff]
    %v581 = vld [vmem:[%s573 + $0x38] sm:$0xff]
    %583 = vset.pattern.permute.xlu0 0
    %584 = vperm.xlu0 %583, %v574
    %v585 = vpop.permute.xlu0 %584
    %588 = vset.pattern.permute.xlu0 0
    %589 = vperm.xlu0 %588, %v575
    %v590 = vpop.permute.xlu0 %589
    %593 = vset.pattern.permute.xlu0 0
    %594 = vperm.xlu0 %593, %v576
    %v595 = vpop.permute.xlu0 %594
    %598 = vset.pattern.permute.xlu0 0
    %599 = vperm.xlu0 %598, %v577
    %v600 = vpop.permute.xlu0 %599
    %603 = vset.pattern.permute.xlu0 0
    %604 = vperm.xlu0 %603, %v578
    %v605 = vpop.permute.xlu0 %604
    %608 = vset.pattern.permute.xlu0 0
    %609 = vperm.xlu0 %608, %v579
    %v610 = vpop.permute.xlu0 %609
    %613 = vset.pattern.permute.xlu0 0
    %614 = vperm.xlu0 %613, %v580
    %v615 = vpop.permute.xlu0 %614
    %618 = vset.pattern.permute.xlu0 0
    %619 = vperm.xlu0 %618, %v581
    %v620 = vpop.permute.xlu0 %619
    %v623 = vsel %vm103, %v565, 0
    %v626 = vsel %vm103, %v566, 0
    %v629 = vsel %vm103, %v567, 0
    %v632 = vsel %vm103, %v568, 0
    %v635 = vsel %vm103, %v569, 0
    %v638 = vsel %vm103, %v570, 0
    %v641 = vsel %vm103, %v571, 0
    %v644 = vsel %vm103, %v572, 0
    %646 = vmatprep.subr.mxu0 %v549
    %647 = vmatpush1.msra.mxu0 %v548
    %648 = vmatprep.subr.mxu0 %v551
    %649 = vmatpush1.msra.mxu0 %v550
    %650 = vmatprep.subr.mxu0 %v553
    %651 = vmatpush1.msra.mxu0 %v552
    %652 = vmatprep.subr.mxu0 %v555
    %653 = vmatpush1.msra.mxu0 %v554
    %654 = vmatprep.subr.mxu0 %v557
    %655 = vmatpush1.msra.mxu0 %v556
    %656 = vmatprep.subr.mxu0 %v559
    %657 = vmatpush1.msra.mxu0 %v558
    %658 = vmatprep.subr.mxu0 %v561
    %659 = vmatpush1.msra.mxu0 %v560
    %660 = vmatprep.subr.mxu0 %v563
    %661 = vmatpush1.msra.mxu0 %v562
    %662 = vmatprep.subr.mxu0 0.0
    %663 = vmatpush1.msra.mxu0 0.0
    %664 = vmatprep.subr.mxu0 0.0
    %665 = vmatpush1.msra.mxu0 0.0
    %666 = vmatprep.subr.mxu0 0.0
    %667 = vmatpush1.msra.mxu0 0.0
    %668 = vmatprep.subr.mxu0 0.0
    %669 = vmatpush1.msra.mxu0 0.0
    %670 = vmatprep.subr.mxu0 0.0
    %671 = vmatpush1.msra.mxu0 0.0
    %672 = vmatprep.subr.mxu0 0.0
    %673 = vmatpush1.msra.mxu0 0.0
    %674 = vmatprep.subr.mxu0 0.0
    %675 = vmatpush1.msra.mxu0 0.0
    %676 = vmatprep.subr.mxu0 0.0
    %677 = vmatpush1.msra.mxu0 0.0
    %678 = vmatprep.subr.mxu0 0.0
    %679 = vmatpush1.msra.mxu0 0.0
    %680 = vmatprep.subr.mxu0 0.0
    %681 = vmatpush1.msra.mxu0 0.0
    %682 = vmatprep.subr.mxu0 0.0
    %683 = vmatpush1.msra.mxu0 0.0
    %684 = vmatprep.subr.mxu0 0.0
    %685 = vmatpush1.msra.mxu0 0.0
    %686 = vmatprep.subr.mxu0 0.0
    %687 = vmatpush1.msra.mxu0 0.0
    %688 = vmatprep.subr.mxu0 0.0
    %689 = vmatpush1.msra.mxu0 0.0
    %690 = vmatprep.subr.mxu0 0.0
    %691 = vmatpush1.msra.mxu0 0.0
    %692 = vmatprep.subr.mxu0 0.0
    %693 = vmatpush1.msra.mxu0 0.0
    %694 = vmatprep.subr.mxu0 0.0
    %695 = vmatpush1.msra.mxu0 0.0
    %696 = vmatprep.subr.mxu0 0.0
    %697 = vmatpush1.msra.mxu0 0.0
    %698 = vmatprep.subr.mxu0 0.0
    %699 = vmatpush1.msra.mxu0 0.0
    %700 = vmatprep.subr.mxu0 0.0
    %701 = vmatpush1.msra.mxu0 0.0
    %702 = vmatprep.subr.mxu0 0.0
    %703 = vmatpush1.msra.mxu0 0.0
    %704 = vmatprep.subr.mxu0 0.0
    %705 = vmatpush1.msra.mxu0 0.0
    %706 = vmatprep.subr.mxu0 0.0
    %707 = vmatpush1.msra.mxu0 0.0
    %708 = vmatprep.subr.mxu0 0.0
    %709 = vmatpush1.msra.mxu0 0.0
    %710 = vmatprep.mubr.f32.mxu0 0.0
    %711 = vmatmul.mubr.f32.gmra.mrb[0].mxu0 %v623
    %v712 = vpop.f32.mrb[0].mxu0
    %v713 = vadd.f32 %v585, %v712
    %v714 = vpop.f32.mrb[0].mxu0
    %v715 = vadd.f32 %v585, %v714
    %716 = vmatprep.mubr.f32.mxu0 0.0
    %717 = vmatmul.mubr.f32.gmra.mrb[0].mxu0 %v626
    %v718 = vpop.f32.mrb[0].mxu0
    %v719 = vadd.f32 %v590, %v718
    %v720 = vpop.f32.mrb[0].mxu0
    %v721 = vadd.f32 %v590, %v720
    %722 = vmatprep.mubr.f32.mxu0 0.0
    %723 = vmatmul.mubr.f32.gmra.mrb[0].mxu0 %v629
    %v724 = vpop.f32.mrb[0].mxu0
    %v725 = vadd.f32 %v595, %v724
    %v726 = vpop.f32.mrb[0].mxu0
    %v727 = vadd.f32 %v595, %v726
    %728 = vmatprep.mubr.f32.mxu0 0.0
    %729 = vmatmul.mubr.f32.gmra.mrb[0].mxu0 %v632
    %v730 = vpop.f32.mrb[0].mxu0
    %v731 = vadd.f32 %v600, %v730
    %v732 = vpop.f32.mrb[0].mxu0
    %v733 = vadd.f32 %v600, %v732
    %734 = vmatprep.mubr.f32.mxu0 0.0
    %735 = vmatmul.mubr.f32.gmra.mrb[0].mxu0 %v635
    %v736 = vpop.f32.mrb[0].mxu0
    %v737 = vadd.f32 %v605, %v736
    %v738 = vpop.f32.mrb[0].mxu0
    %v739 = vadd.f32 %v605, %v738
    %740 = vmatprep.mubr.f32.mxu0 0.0
    %741 = vmatmul.mubr.f32.gmra.mrb[0].mxu0 %v638
    %v742 = vpop.f32.mrb[0].mxu0
    %v743 = vadd.f32 %v610, %v742
    %v744 = vpop.f32.mrb[0].mxu0
    %v745 = vadd.f32 %v610, %v744
    %746 = vmatprep.mubr.f32.mxu0 0.0
    %747 = vmatmul.mubr.f32.gmra.mrb[0].mxu0 %v641
    %v748 = vpop.f32.mrb[0].mxu0
    %v749 = vadd.f32 %v615, %v748
    %v750 = vpop.f32.mrb[0].mxu0
    %v751 = vadd.f32 %v615, %v750
    %752 = vmatprep.mubr.f32.mxu0 0.0
    %753 = vmatmul.mubr.f32.gmra.mrb[0].mxu0 %v644
    %v754 = vpop.f32.mrb[0].mxu0
    %v755 = vadd.f32 %v620, %v754
    %v756 = vpop.f32.mrb[0].mxu0
    %v757 = vadd.f32 %v620, %v756
    %758 = vdwg.mxu0
    %759 = vst [vmem:[#allocation2 + $0x80] sm:$0xff] %v713
    %760 = vst [vmem:[#allocation2 + $0x88] sm:$0xff] %v715
    %s761 = scalar_lea.vmem %s1, 192
    %v762 = vld [vmem:[%s761] sm:$0xff]
    %v763 = vld [vmem:[%s761 + $0x8] sm:$0xff]
    %v764 = vld [vmem:[%s761 + $0x10] sm:$0xff]
    %v765 = vld [vmem:[%s761 + $0x18] sm:$0xff]
    %v766 = vld [vmem:[%s761 + $0x20] sm:$0xff]
    %v767 = vld [vmem:[%s761 + $0x28] sm:$0xff]
    %v768 = vld [vmem:[%s761 + $0x30] sm:$0xff]
    %v769 = vld [vmem:[%s761 + $0x38] sm:$0xff]
    %s770 = scalar_lea.vmem %s2, 192
    %v771 = vld [vmem:[%s770] sm:$0xff]
    %v772 = vld [vmem:[%s770 + $0x8] sm:$0xff]
    %v773 = vld [vmem:[%s770 + $0x10] sm:$0xff]
    %v774 = vld [vmem:[%s770 + $0x18] sm:$0xff]
    %v775 = vld [vmem:[%s770 + $0x20] sm:$0xff]
    %v776 = vld [vmem:[%s770 + $0x28] sm:$0xff]
    %v777 = vld [vmem:[%s770 + $0x30] sm:$0xff]
    %v778 = vld [vmem:[%s770 + $0x38] sm:$0xff]
    %780 = vset.pattern.permute.xlu0 0
    %781 = vperm.xlu0 %780, %v771
    %v782 = vpop.permute.xlu0 %781
    %785 = vset.pattern.permute.xlu0 0
    %786 = vperm.xlu0 %785, %v772
    %v787 = vpop.permute.xlu0 %786
    %790 = vset.pattern.permute.xlu0 0
    %791 = vperm.xlu0 %790, %v773
    %v792 = vpop.permute.xlu0 %791
    %795 = vset.pattern.permute.xlu0 0
    %796 = vperm.xlu0 %795, %v774
    %v797 = vpop.permute.xlu0 %796
    %800 = vset.pattern.permute.xlu0 0
    %801 = vperm.xlu0 %800, %v775
    %v802 = vpop.permute.xlu0 %801
    %805 = vset.pattern.permute.xlu0 0
    %806 = vperm.xlu0 %805, %v776
    %v807 = vpop.permute.xlu0 %806
    %810 = vset.pattern.permute.xlu0 0
    %811 = vperm.xlu0 %810, %v777
    %v812 = vpop.permute.xlu0 %811
    %815 = vset.pattern.permute.xlu0 0
    %816 = vperm.xlu0 %815, %v778
    %v817 = vpop.permute.xlu0 %816
    %v820 = vsel %vm103, %v762, 0
    %v823 = vsel %vm103, %v763, 0
    %v826 = vsel %vm103, %v764, 0
    %v829 = vsel %vm103, %v765, 0
    %v832 = vsel %vm103, %v766, 0
    %v835 = vsel %vm103, %v767, 0
    %v838 = vsel %vm103, %v768, 0
    %v841 = vsel %vm103, %v769, 0
    %843 = vmatprep.subr.mxu0 %v715
    %844 = vmatpush1.msra.mxu0 %v713
    %845 = vmatprep.subr.mxu0 %v721
    %846 = vmatpush1.msra.mxu0 %v719
    %847 = vmatprep.subr.mxu0 %v727
    %848 = vmatpush1.msra.mxu0 %v725
    %849 = vmatprep.subr.mxu0 %v733
    %850 = vmatpush1.msra.mxu0 %v731
    %851 = vmatprep.subr.mxu0 %v739
    %852 = vmatpush1.msra.mxu0 %v737
    %853 = vmatprep.subr.mxu0 %v745
    %854 = vmatpush1.msra.mxu0 %v743
    %855 = vmatprep.subr.mxu0 %v751
    %856 = vmatpush1.msra.mxu0 %v749
    %857 = vmatprep.subr.mxu0 %v757
    %858 = vmatpush1.msra.mxu0 %v755
    %859 = vmatprep.subr.mxu0 0.0
    %860 = vmatpush1.msra.mxu0 0.0
    %861 = vmatprep.subr.mxu0 0.0
    %862 = vmatpush1.msra.mxu0 0.0
    %863 = vmatprep.subr.mxu0 0.0
    %864 = vmatpush1.msra.mxu0 0.0
    %865 = vmatprep.subr.mxu0 0.0
    %866 = vmatpush1.msra.mxu0 0.0
    %867 = vmatprep.subr.mxu0 0.0
    %868 = vmatpush1.msra.mxu0 0.0
    %869 = vmatprep.subr.mxu0 0.0
    %870 = vmatpush1.msra.mxu0 0.0
    %871 = vmatprep.subr.mxu0 0.0
    %872 = vmatpush1.msra.mxu0 0.0
    %873 = vmatprep.subr.mxu0 0.0
    %874 = vmatpush1.msra.mxu0 0.0
    %875 = vmatprep.subr.mxu0 0.0
    %876 = vmatpush1.msra.mxu0 0.0
    %877 = vmatprep.subr.mxu0 0.0
    %878 = vmatpush1.msra.mxu0 0.0
    %879 = vmatprep.subr.mxu0 0.0
    %880 = vmatpush1.msra.mxu0 0.0
    %881 = vmatprep.subr.mxu0 0.0
    %882 = vmatpush1.msra.mxu0 0.0
    %883 = vmatprep.subr.mxu0 0.0
    %884 = vmatpush1.msra.mxu0 0.0
    %885 = vmatprep.subr.mxu0 0.0
    %886 = vmatpush1.msra.mxu0 0.0
    %887 = vmatprep.subr.mxu0 0.0
    %888 = vmatpush1.msra.mxu0 0.0
    %889 = vmatprep.subr.mxu0 0.0
    %890 = vmatpush1.msra.mxu0 0.0
    %891 = vmatprep.subr.mxu0 0.0
    %892 = vmatpush1.msra.mxu0 0.0
    %893 = vmatprep.subr.mxu0 0.0
    %894 = vmatpush1.msra.mxu0 0.0
    %895 = vmatprep.subr.mxu0 0.0
    %896 = vmatpush1.msra.mxu0 0.0
    %897 = vmatprep.subr.mxu0 0.0
    %898 = vmatpush1.msra.mxu0 0.0
    %899 = vmatprep.subr.mxu0 0.0
    %900 = vmatpush1.msra.mxu0 0.0
    %901 = vmatprep.subr.mxu0 0.0
    %902 = vmatpush1.msra.mxu0 0.0
    %903 = vmatprep.subr.mxu0 0.0
    %904 = vmatpush1.msra.mxu0 0.0
    %905 = vmatprep.subr.mxu0 0.0
    %906 = vmatpush1.msra.mxu0 0.0
    %907 = vmatprep.mubr.f32.mxu0 0.0
    %908 = vmatmul.mubr.f32.gmra.mrb[0].mxu0 %v820
    %v909 = vpop.f32.mrb[0].mxu0
    %v910 = vadd.f32 %v782, %v909
    %v911 = vpop.f32.mrb[0].mxu0
    %v912 = vadd.f32 %v782, %v911
    %913 = vmatprep.mubr.f32.mxu0 0.0
    %914 = vmatmul.mubr.f32.gmra.mrb[0].mxu0 %v823
    %v915 = vpop.f32.mrb[0].mxu0
    %v916 = vadd.f32 %v787, %v915
    %v917 = vpop.f32.mrb[0].mxu0
    %v918 = vadd.f32 %v787, %v917
    %919 = vmatprep.mubr.f32.mxu0 0.0
    %920 = vmatmul.mubr.f32.gmra.mrb[0].mxu0 %v826
    %v921 = vpop.f32.mrb[0].mxu0
    %v922 = vadd.f32 %v792, %v921
    %v923 = vpop.f32.mrb[0].mxu0
    %v924 = vadd.f32 %v792, %v923
    %925 = vmatprep.mubr.f32.mxu0 0.0
    %926 = vmatmul.mubr.f32.gmra.mrb[0].mxu0 %v829
    %v927 = vpop.f32.mrb[0].mxu0
    %v928 = vadd.f32 %v797, %v927
    %v929 = vpop.f32.mrb[0].mxu0
    %v930 = vadd.f32 %v797, %v929
    %931 = vmatprep.mubr.f32.mxu0 0.0
    %932 = vmatmul.mubr.f32.gmra.mrb[0].mxu0 %v832
    %v933 = vpop.f32.mrb[0].mxu0
    %v934 = vadd.f32 %v802, %v933
    %v935 = vpop.f32.mrb[0].mxu0
    %v936 = vadd.f32 %v802, %v935
    %937 = vmatprep.mubr.f32.mxu0 0.0
    %938 = vmatmul.mubr.f32.gmra.mrb[0].mxu0 %v835
    %v939 = vpop.f32.mrb[0].mxu0
    %v940 = vadd.f32 %v807, %v939
    %v941 = vpop.f32.mrb[0].mxu0
    %v942 = vadd.f32 %v807, %v941
    %943 = vmatprep.mubr.f32.mxu0 0.0
    %944 = vmatmul.mubr.f32.gmra.mrb[0].mxu0 %v838
    %v945 = vpop.f32.mrb[0].mxu0
    %v946 = vadd.f32 %v812, %v945
    %v947 = vpop.f32.mrb[0].mxu0
    %v948 = vadd.f32 %v812, %v947
    %949 = vmatprep.mubr.f32.mxu0 0.0
    %950 = vmatmul.mubr.f32.gmra.mrb[0].mxu0 %v841
    %v951 = vpop.f32.mrb[0].mxu0
    %v952 = vadd.f32 %v817, %v951
    %v953 = vpop.f32.mrb[0].mxu0
    %v954 = vadd.f32 %v817, %v953
    %955 = vdwg.mxu0
    %v956 = vmax.f32 %v910, 0.0
    %v957 = vmax.f32 %v912, 0.0
    %v958 = vmax.f32 %v916, 0.0
    %v959 = vmax.f32 %v918, 0.0
    %v960 = vmax.f32 %v922, 0.0
    %v961 = vmax.f32 %v924, 0.0
    %v962 = vmax.f32 %v928, 0.0
    %v963 = vmax.f32 %v930, 0.0
    %v964 = vmax.f32 %v934, 0.0
    %v965 = vmax.f32 %v936, 0.0
    %v966 = vmax.f32 %v940, 0.0
    %v967 = vmax.f32 %v942, 0.0
    %v968 = vmax.f32 %v946, 0.0
    %v969 = vmax.f32 %v948, 0.0
    %v970 = vmax.f32 %v952, 0.0
    %v971 = vmax.f32 %v954, 0.0
    %s972 = scalar_lea.vmem %s1, 256
    %v973 = vld [vmem:[%s972] sm:$0xff]
    %v974 = vld [vmem:[%s972 + $0x8] sm:$0xff]
    %v975 = vld [vmem:[%s972 + $0x10] sm:$0xff]
    %v976 = vld [vmem:[%s972 + $0x18] sm:$0xff]
    %v977 = vld [vmem:[%s972 + $0x20] sm:$0xff]
    %v978 = vld [vmem:[%s972 + $0x28] sm:$0xff]
    %v979 = vld [vmem:[%s972 + $0x30] sm:$0xff]
    %v980 = vld [vmem:[%s972 + $0x38] sm:$0xff]
    %s981 = scalar_lea.vmem %s2, 256
    %v982 = vld [vmem:[%s981] sm:$0xff]
    %v983 = vld [vmem:[%s981 + $0x8] sm:$0xff]
    %v984 = vld [vmem:[%s981 + $0x10] sm:$0xff]
    %v985 = vld [vmem:[%s981 + $0x18] sm:$0xff]
    %v986 = vld [vmem:[%s981 + $0x20] sm:$0xff]
    %v987 = vld [vmem:[%s981 + $0x28] sm:$0xff]
    %v988 = vld [vmem:[%s981 + $0x30] sm:$0xff]
    %v989 = vld [vmem:[%s981 + $0x38] sm:$0xff]
    %991 = vset.pattern.permute.xlu0 0
    %992 = vperm.xlu0 %991, %v982
    %v993 = vpop.permute.xlu0 %992
    %996 = vset.pattern.permute.xlu0 0
    %997 = vperm.xlu0 %996, %v983
    %v998 = vpop.permute.xlu0 %997
    %1001 = vset.pattern.permute.xlu0 0
    %1002 = vperm.xlu0 %1001, %v984
    %v1003 = vpop.permute.xlu0 %1002
    %1006 = vset.pattern.permute.xlu0 0
    %1007 = vperm.xlu0 %1006, %v985
    %v1008 = vpop.permute.xlu0 %1007
    %1011 = vset.pattern.permute.xlu0 0
    %1012 = vperm.xlu0 %1011, %v986
    %v1013 = vpop.permute.xlu0 %1012
    %1016 = vset.pattern.permute.xlu0 0
    %1017 = vperm.xlu0 %1016, %v987
    %v1018 = vpop.permute.xlu0 %1017
    %1021 = vset.pattern.permute.xlu0 0
    %1022 = vperm.xlu0 %1021, %v988
    %v1023 = vpop.permute.xlu0 %1022
    %1026 = vset.pattern.permute.xlu0 0
    %1027 = vperm.xlu0 %1026, %v989
    %v1028 = vpop.permute.xlu0 %1027
    %v1031 = vsel %vm103, %v973, 0
    %v1034 = vsel %vm103, %v974, 0
    %v1037 = vsel %vm103, %v975, 0
    %v1040 = vsel %vm103, %v976, 0
    %v1043 = vsel %vm103, %v977, 0
    %v1046 = vsel %vm103, %v978, 0
    %v1049 = vsel %vm103, %v979, 0
    %v1052 = vsel %vm103, %v980, 0
    %1054 = vmatprep.subr.mxu0 %v957
    %1055 = vmatpush1.msra.mxu0 %v956
    %1056 = vmatprep.subr.mxu0 %v959
    %1057 = vmatpush1.msra.mxu0 %v958
    %1058 = vmatprep.subr.mxu0 %v961
    %1059 = vmatpush1.msra.mxu0 %v960
    %1060 = vmatprep.subr.mxu0 %v963
    %1061 = vmatpush1.msra.mxu0 %v962
    %1062 = vmatprep.subr.mxu0 %v965
    %1063 = vmatpush1.msra.mxu0 %v964
    %1064 = vmatprep.subr.mxu0 %v967
    %1065 = vmatpush1.msra.mxu0 %v966
    %1066 = vmatprep.subr.mxu0 %v969
    %1067 = vmatpush1.msra.mxu0 %v968
    %1068 = vmatprep.subr.mxu0 %v971
    %1069 = vmatpush1.msra.mxu0 %v970
    %1070 = vmatprep.subr.mxu0 0.0
    %1071 = vmatpush1.msra.mxu0 0.0
    %1072 = vmatprep.subr.mxu0 0.0
    %1073 = vmatpush1.msra.mxu0 0.0
    %1074 = vmatprep.subr.mxu0 0.0
    %1075 = vmatpush1.msra.mxu0 0.0
    %1076 = vmatprep.subr.mxu0 0.0
    %1077 = vmatpush1.msra.mxu0 0.0
    %1078 = vmatprep.subr.mxu0 0.0
    %1079 = vmatpush1.msra.mxu0 0.0
    %1080 = vmatprep.subr.mxu0 0.0
    %1081 = vmatpush1.msra.mxu0 0.0
    %1082 = vmatprep.subr.mxu0 0.0
    %1083 = vmatpush1.msra.mxu0 0.0
    %1084 = vmatprep.subr.mxu0 0.0
    %1085 = vmatpush1.msra.mxu0 0.0
    %1086 = vmatprep.subr.mxu0 0.0
    %1087 = vmatpush1.msra.mxu0 0.0
    %1088 = vmatprep.subr.mxu0 0.0
    %1089 = vmatpush1.msra.mxu0 0.0
    %1090 = vmatprep.subr.mxu0 0.0
    %1091 = vmatpush1.msra.mxu0 0.0
    %1092 = vmatprep.subr.mxu0 0.0
    %1093 = vmatpush1.msra.mxu0 0.0
    %1094 = vmatprep.subr.mxu0 0.0
    %1095 = vmatpush1.msra.mxu0 0.0
    %1096 = vmatprep.subr.mxu0 0.0
    %1097 = vmatpush1.msra.mxu0 0.0
    %1098 = vmatprep.subr.mxu0 0.0
    %1099 = vmatpush1.msra.mxu0 0.0
    %1100 = vmatprep.subr.mxu0 0.0
    %1101 = vmatpush1.msra.mxu0 0.0
    %1102 = vmatprep.subr.mxu0 0.0
    %1103 = vmatpush1.msra.mxu0 0.0
    %1104 = vmatprep.subr.mxu0 0.0
    %1105 = vmatpush1.msra.mxu0 0.0
    %1106 = vmatprep.subr.mxu0 0.0
    %1107 = vmatpush1.msra.mxu0 0.0
    %1108 = vmatprep.subr.mxu0 0.0
    %1109 = vmatpush1.msra.mxu0 0.0
    %1110 = vmatprep.subr.mxu0 0.0
    %1111 = vmatpush1.msra.mxu0 0.0
    %1112 = vmatprep.subr.mxu0 0.0
    %1113 = vmatpush1.msra.mxu0 0.0
    %1114 = vmatprep.subr.mxu0 0.0
    %1115 = vmatpush1.msra.mxu0 0.0
    %1116 = vmatprep.subr.mxu0 0.0
    %1117 = vmatpush1.msra.mxu0 0.0
    %1118 = vmatprep.mubr.f32.mxu0 0.0
    %1119 = vmatmul.mubr.f32.gmra.mrb[0].mxu0 %v1031
    %v1120 = vpop.f32.mrb[0].mxu0
    %v1121 = vadd.f32 %v993, %v1120
    %v1122 = vpop.f32.mrb[0].mxu0
    %v1123 = vadd.f32 %v993, %v1122
    %1124 = vmatprep.mubr.f32.mxu0 0.0
    %1125 = vmatmul.mubr.f32.gmra.mrb[0].mxu0 %v1034
    %v1126 = vpop.f32.mrb[0].mxu0
    %v1127 = vadd.f32 %v998, %v1126
    %v1128 = vpop.f32.mrb[0].mxu0
    %v1129 = vadd.f32 %v998, %v1128
    %1130 = vmatprep.mubr.f32.mxu0 0.0
    %1131 = vmatmul.mubr.f32.gmra.mrb[0].mxu0 %v1037
    %v1132 = vpop.f32.mrb[0].mxu0
    %v1133 = vadd.f32 %v1003, %v1132
    %v1134 = vpop.f32.mrb[0].mxu0
    %v1135 = vadd.f32 %v1003, %v1134
    %1136 = vmatprep.mubr.f32.mxu0 0.0
    %1137 = vmatmul.mubr.f32.gmra.mrb[0].mxu0 %v1040
    %v1138 = vpop.f32.mrb[0].mxu0
    %v1139 = vadd.f32 %v1008, %v1138
    %v1140 = vpop.f32.mrb[0].mxu0
    %v1141 = vadd.f32 %v1008, %v1140
    %1142 = vmatprep.mubr.f32.mxu0 0.0
    %1143 = vmatmul.mubr.f32.gmra.mrb[0].mxu0 %v1043
    %v1144 = vpop.f32.mrb[0].mxu0
    %v1145 = vadd.f32 %v1013, %v1144
    %v1146 = vpop.f32.mrb[0].mxu0
    %v1147 = vadd.f32 %v1013, %v1146
    %1148 = vmatprep.mubr.f32.mxu0 0.0
    %1149 = vmatmul.mubr.f32.gmra.mrb[0].mxu0 %v1046
    %v1150 = vpop.f32.mrb[0].mxu0
    %v1151 = vadd.f32 %v1018, %v1150
    %v1152 = vpop.f32.mrb[0].mxu0
    %v1153 = vadd.f32 %v1018, %v1152
    %1154 = vmatprep.mubr.f32.mxu0 0.0
    %1155 = vmatmul.mubr.f32.gmra.mrb[0].mxu0 %v1049
    %v1156 = vpop.f32.mrb[0].mxu0
    %v1157 = vadd.f32 %v1023, %v1156
    %v1158 = vpop.f32.mrb[0].mxu0
    %v1159 = vadd.f32 %v1023, %v1158
    %1160 = vmatprep.mubr.f32.mxu0 0.0
    %1161 = vmatmul.mubr.f32.gmra.mrb[0].mxu0 %v1052
    %v1162 = vpop.f32.mrb[0].mxu0
    %v1163 = vadd.f32 %v1028, %v1162
    %v1164 = vpop.f32.mrb[0].mxu0
    %v1165 = vadd.f32 %v1028, %v1164
    %1166 = vdwg.mxu0
    %v1167 = vmax.f32 %v1121, 0.0
    %v1168 = vmax.f32 %v1123, 0.0
    %v1169 = vmax.f32 %v1127, 0.0
    %v1170 = vmax.f32 %v1129, 0.0
    %v1171 = vmax.f32 %v1133, 0.0
    %v1172 = vmax.f32 %v1135, 0.0
    %v1173 = vmax.f32 %v1139, 0.0
    %v1174 = vmax.f32 %v1141, 0.0
    %v1175 = vmax.f32 %v1145, 0.0
    %v1176 = vmax.f32 %v1147, 0.0
    %v1177 = vmax.f32 %v1151, 0.0
    %v1178 = vmax.f32 %v1153, 0.0
    %v1179 = vmax.f32 %v1157, 0.0
    %v1180 = vmax.f32 %v1159, 0.0
    %v1181 = vmax.f32 %v1163, 0.0
    %v1182 = vmax.f32 %v1165, 0.0
    %s1183 = scalar_lea.vmem %s1, 320
    %v1184 = vld [vmem:[%s1183] sm:$0xff]
    %v1185 = vld [vmem:[%s1183 + $0x8] sm:$0xff]
    %v1186 = vld [vmem:[%s1183 + $0x10] sm:$0xff]
    %v1187 = vld [vmem:[%s1183 + $0x18] sm:$0xff]
    %v1188 = vld [vmem:[%s1183 + $0x20] sm:$0xff]
    %v1189 = vld [vmem:[%s1183 + $0x28] sm:$0xff]
    %v1190 = vld [vmem:[%s1183 + $0x30] sm:$0xff]
    %v1191 = vld [vmem:[%s1183 + $0x38] sm:$0xff]
    %s1192 = scalar_lea.vmem %s2, 320
    %v1193 = vld [vmem:[%s1192] sm:$0xff]
    %v1194 = vld [vmem:[%s1192 + $0x8] sm:$0xff]
    %v1195 = vld [vmem:[%s1192 + $0x10] sm:$0xff]
    %v1196 = vld [vmem:[%s1192 + $0x18] sm:$0xff]
    %v1197 = vld [vmem:[%s1192 + $0x20] sm:$0xff]
    %v1198 = vld [vmem:[%s1192 + $0x28] sm:$0xff]
    %v1199 = vld [vmem:[%s1192 + $0x30] sm:$0xff]
    %v1200 = vld [vmem:[%s1192 + $0x38] sm:$0xff]
    %1202 = vset.pattern.permute.xlu0 0
    %1203 = vperm.xlu0 %1202, %v1193
    %v1204 = vpop.permute.xlu0 %1203
    %1207 = vset.pattern.permute.xlu0 0
    %1208 = vperm.xlu0 %1207, %v1194
    %v1209 = vpop.permute.xlu0 %1208
    %1212 = vset.pattern.permute.xlu0 0
    %1213 = vperm.xlu0 %1212, %v1195
    %v1214 = vpop.permute.xlu0 %1213
    %1217 = vset.pattern.permute.xlu0 0
    %1218 = vperm.xlu0 %1217, %v1196
    %v1219 = vpop.permute.xlu0 %1218
    %1222 = vset.pattern.permute.xlu0 0
    %1223 = vperm.xlu0 %1222, %v1197
    %v1224 = vpop.permute.xlu0 %1223
    %1227 = vset.pattern.permute.xlu0 0
    %1228 = vperm.xlu0 %1227, %v1198
    %v1229 = vpop.permute.xlu0 %1228
    %1232 = vset.pattern.permute.xlu0 0
    %1233 = vperm.xlu0 %1232, %v1199
    %v1234 = vpop.permute.xlu0 %1233
    %1237 = vset.pattern.permute.xlu0 0
    %1238 = vperm.xlu0 %1237, %v1200
    %v1239 = vpop.permute.xlu0 %1238
    %v1242 = vsel %vm103, %v1184, 0
    %v1245 = vsel %vm103, %v1185, 0
    %v1248 = vsel %vm103, %v1186, 0
    %v1251 = vsel %vm103, %v1187, 0
    %v1254 = vsel %vm103, %v1188, 0
    %v1257 = vsel %vm103, %v1189, 0
    %v1260 = vsel %vm103, %v1190, 0
    %v1263 = vsel %vm103, %v1191, 0
    %1265 = vmatprep.subr.mxu0 %v1168
    %1266 = vmatpush1.msra.mxu0 %v1167
    %1267 = vmatprep.subr.mxu0 %v1170
    %1268 = vmatpush1.msra.mxu0 %v1169
    %1269 = vmatprep.subr.mxu0 %v1172
    %1270 = vmatpush1.msra.mxu0 %v1171
    %1271 = vmatprep.subr.mxu0 %v1174
    %1272 = vmatpush1.msra.mxu0 %v1173
    %1273 = vmatprep.subr.mxu0 %v1176
    %1274 = vmatpush1.msra.mxu0 %v1175
    %1275 = vmatprep.subr.mxu0 %v1178
    %1276 = vmatpush1.msra.mxu0 %v1177
    %1277 = vmatprep.subr.mxu0 %v1180
    %1278 = vmatpush1.msra.mxu0 %v1179
    %1279 = vmatprep.subr.mxu0 %v1182
    %1280 = vmatpush1.msra.mxu0 %v1181
    %1281 = vmatprep.subr.mxu0 0.0
    %1282 = vmatpush1.msra.mxu0 0.0
    %1283 = vmatprep.subr.mxu0 0.0
    %1284 = vmatpush1.msra.mxu0 0.0
    %1285 = vmatprep.subr.mxu0 0.0
    %1286 = vmatpush1.msra.mxu0 0.0
    %1287 = vmatprep.subr.mxu0 0.0
    %1288 = vmatpush1.msra.mxu0 0.0
    %1289 = vmatprep.subr.mxu0 0.0
    %1290 = vmatpush1.msra.mxu0 0.0
    %1291 = vmatprep.subr.mxu0 0.0
    %1292 = vmatpush1.msra.mxu0 0.0
    %1293 = vmatprep.subr.mxu0 0.0
    %1294 = vmatpush1.msra.mxu0 0.0
    %1295 = vmatprep.subr.mxu0 0.0
    %1296 = vmatpush1.msra.mxu0 0.0
    %1297 = vmatprep.subr.mxu0 0.0
    %1298 = vmatpush1.msra.mxu0 0.0
    %1299 = vmatprep.subr.mxu0 0.0
    %1300 = vmatpush1.msra.mxu0 0.0
    %1301 = vmatprep.subr.mxu0 0.0
    %1302 = vmatpush1.msra.mxu0 0.0
    %1303 = vmatprep.subr.mxu0 0.0
    %1304 = vmatpush1.msra.mxu0 0.0
    %1305 = vmatprep.subr.mxu0 0.0
    %1306 = vmatpush1.msra.mxu0 0.0
    %1307 = vmatprep.subr.mxu0 0.0
    %1308 = vmatpush1.msra.mxu0 0.0
    %1309 = vmatprep.subr.mxu0 0.0
    %1310 = vmatpush1.msra.mxu0 0.0
    %1311 = vmatprep.subr.mxu0 0.0
    %1312 = vmatpush1.msra.mxu0 0.0
    %1313 = vmatprep.subr.mxu0 0.0
    %1314 = vmatpush1.msra.mxu0 0.0
    %1315 = vmatprep.subr.mxu0 0.0
    %1316 = vmatpush1.msra.mxu0 0.0
    %1317 = vmatprep.subr.mxu0 0.0
    %1318 = vmatpush1.msra.mxu0 0.0
    %1319 = vmatprep.subr.mxu0 0.0
    %1320 = vmatpush1.msra.mxu0 0.0
    %1321 = vmatprep.subr.mxu0 0.0
    %1322 = vmatpush1.msra.mxu0 0.0
    %1323 = vmatprep.subr.mxu0 0.0
    %1324 = vmatpush1.msra.mxu0 0.0
    %1325 = vmatprep.subr.mxu0 0.0
    %1326 = vmatpush1.msra.mxu0 0.0
    %1327 = vmatprep.subr.mxu0 0.0
    %1328 = vmatpush1.msra.mxu0 0.0
    %1329 = vmatprep.mubr.f32.mxu0 0.0
    %1330 = vmatmul.mubr.f32.gmra.mrb[0].mxu0 %v1242
    %v1331 = vpop.f32.mrb[0].mxu0
    %v1332 = vadd.f32 %v1204, %v1331
    %v1333 = vpop.f32.mrb[0].mxu0
    %v1334 = vadd.f32 %v1204, %v1333
    %1335 = vmatprep.mubr.f32.mxu0 0.0
    %1336 = vmatmul.mubr.f32.gmra.mrb[0].mxu0 %v1245
    %v1337 = vpop.f32.mrb[0].mxu0
    %v1338 = vadd.f32 %v1209, %v1337
    %v1339 = vpop.f32.mrb[0].mxu0
    %v1340 = vadd.f32 %v1209, %v1339
    %1341 = vmatprep.mubr.f32.mxu0 0.0
    %1342 = vmatmul.mubr.f32.gmra.mrb[0].mxu0 %v1248
    %v1343 = vpop.f32.mrb[0].mxu0
    %v1344 = vadd.f32 %v1214, %v1343
    %v1345 = vpop.f32.mrb[0].mxu0
    %v1346 = vadd.f32 %v1214, %v1345
    %1347 = vmatprep.mubr.f32.mxu0 0.0
    %1348 = vmatmul.mubr.f32.gmra.mrb[0].mxu0 %v1251
    %v1349 = vpop.f32.mrb[0].mxu0
    %v1350 = vadd.f32 %v1219, %v1349
    %v1351 = vpop.f32.mrb[0].mxu0
    %v1352 = vadd.f32 %v1219, %v1351
    %1353 = vmatprep.mubr.f32.mxu0 0.0
    %1354 = vmatmul.mubr.f32.gmra.mrb[0].mxu0 %v1254
    %v1355 = vpop.f32.mrb[0].mxu0
    %v1356 = vadd.f32 %v1224, %v1355
    %v1357 = vpop.f32.mrb[0].mxu0
    %v1358 = vadd.f32 %v1224, %v1357
    %1359 = vmatprep.mubr.f32.mxu0 0.0
    %1360 = vmatmul.mubr.f32.gmra.mrb[0].mxu0 %v1257
    %v1361 = vpop.f32.mrb[0].mxu0
    %v1362 = vadd.f32 %v1229, %v1361
    %v1363 = vpop.f32.mrb[0].mxu0
    %v1364 = vadd.f32 %v1229, %v1363
    %1365 = vmatprep.mubr.f32.mxu0 0.0
    %1366 = vmatmul.mubr.f32.gmra.mrb[0].mxu0 %v1260
    %v1367 = vpop.f32.mrb[0].mxu0
    %v1368 = vadd.f32 %v1234, %v1367
    %v1369 = vpop.f32.mrb[0].mxu0
    %v1370 = vadd.f32 %v1234, %v1369
    %1371 = vmatprep.mubr.f32.mxu0 0.0
    %1372 = vmatmul.mubr.f32.gmra.mrb[0].mxu0 %v1263
    %v1373 = vpop.f32.mrb[0].mxu0
    %v1374 = vadd.f32 %v1239, %v1373
    %v1375 = vpop.f32.mrb[0].mxu0
    %v1376 = vadd.f32 %v1239, %v1375
    %1377 = vdwg.mxu0
    %1378 = vst [vmem:[#allocation2] sm:$0xff] %v1332
    %1379 = vst [vmem:[#allocation2 + $0x8] sm:$0xff] %v1334
    %1380 = vst [vmem:[#allocation2 + $0x10] sm:$0xff] %v1338
    %1381 = vst [vmem:[#allocation2 + $0x18] sm:$0xff] %v1340
    %1382 = vst [vmem:[#allocation2 + $0x20] sm:$0xff] %v1344
    %1383 = vst [vmem:[#allocation2 + $0x28] sm:$0xff] %v1346
    %1384 = vst [vmem:[#allocation2 + $0x30] sm:$0xff] %v1350
    %1385 = vst [vmem:[#allocation2 + $0x38] sm:$0xff] %v1352
    %1386 = vst [vmem:[#allocation2 + $0x40] sm:$0xff] %v1356
    %1387 = vst [vmem:[#allocation2 + $0x48] sm:$0xff] %v1358
    %1388 = vst [vmem:[#allocation2 + $0x50] sm:$0xff] %v1362
    %1389 = vst [vmem:[#allocation2 + $0x58] sm:$0xff] %v1364
    %1390 = vst [vmem:[#allocation2 + $0x60] sm:$0xff] %v1368
    %1391 = vst [vmem:[#allocation2 + $0x68] sm:$0xff] %v1370
    %1392 = vst [vmem:[#allocation2 + $0x70] sm:$0xff] %v1374
    %1393 = vst [vmem:[#allocation2 + $0x78] sm:$0xff] %v1376
    // Predicated region
    $region14: #{tpu_custom_call.1} parent=1 // pred_check
      _
    $region15: #{tpu_custom_call.1} parent=1 // pred_check_branch
      %1395 = sbr.rel (0) target = $region17
    $region16: #{tpu_custom_call.1} parent=1 // pred_region
      %s1397 = ssub.s32 2304, 2304
      %1398 = vsyncadd [#allocation3], %s1397
      %s1399 = sshll.u32 [#allocation2], 4
      %s1400 = int_to_ptr.vmem [resolvable:$true] %s1399
      %1405 = dma.vmem_to_hbm [thread:$0]  %s1400, 2304, %s3, [#allocation3], 256, 256, 16
    $region17: #{tpu_custom_call.1} parent=1 // pred_fallthru
      _
    // Predicated region
    $region18: #{tpu_custom_call.1} parent=1 // pred_check
      _
    $region19: #{tpu_custom_call.1} parent=1 // pred_check_branch
      %1407 = sbr.rel (0) target = $region21
    $region20: #{tpu_custom_call.1} parent=1 // pred_region
      %1408 = dma.done [#allocation3], 2304
    $region21: #{tpu_custom_call.1} parent=1 // pred_fallthru
      _
    %1409 = vsyncpa [#allocation3], 1

</llo_original>
